<compile_context>
chip_gen: v5e
topology: v5e:2x2
jax: 0.10.0
libtpu: 0.0.40
codegen_flags: <defaults>
</compile_context>

<pallas_src>
import jax
import jax.numpy as jnp
from jax import lax
from jax.experimental import pallas as pl
from jax.experimental.pallas import tpu as pltpu

EPS = 1e-5


def _round_up(x, m):
    return (x + m - 1) // m * m


def _prenorm_linear_kernel(x_ref, gamma_ref, beta_ref, w_ref, bias_ref,
                           o_ref, xn_ref):
    # Grid = (row_tiles, n_tiles); N is innermost ("arbitrary"), so the x row
    # tile stays resident across N tiles and the normalized activations are
    # computed once per row tile into the bf16 scratch.
    j = pl.program_id(1)

    @pl.when(j == 0)
    def _():
        x = x_ref[...].astype(jnp.float32)                        # (TM, D)
        mean = jnp.mean(x, axis=-1, keepdims=True)                # (TM, 1)
        var = jnp.mean(jnp.square(x - mean), axis=-1, keepdims=True)
        xn = (x - mean) * lax.rsqrt(var + EPS)                    # (TM, D)
        xn = xn * gamma_ref[...] + beta_ref[...]                  # (1, D) bcast
        xn_ref[...] = xn.astype(xn_ref.dtype)                     # f32 -> bf16

    # fn = Linear: bf16 x bf16 MXU matmul, f32 accumulation, + bias.
    y = jnp.dot(xn_ref[...], w_ref[...], preferred_element_type=jnp.float32)
    y = y + bias_ref[...]                                         # (1, TN) bcast
    o_ref[...] = y.astype(o_ref.dtype)


def prenorm_linear(x, gamma, beta, w, bias, *, block_rows=256, block_cols=512):
    """x: (B, S, D).  gamma/beta: (D,).  w: (D, D_out) [= PyTorch W.T].  bias: (D_out,)."""
    B, S, D = x.shape
    D_in, D_out = w.shape
    assert D_in == D

    R = B * S
    x2 = x.reshape(R, D)

    # Row tile: multiple of 8 sublanes, capped by the (padded) row count.
    tm = min(block_rows, _round_up(R, 8))
    R_pad = _round_up(R, tm)
    if R_pad != R:
        x2 = jnp.pad(x2, ((0, R_pad - R), (0, 0)))

    # Output-column tile: 128-aligned tile if it divides D_out, else full width.
    tn = block_cols if (D_out % block_cols == 0) else D_out

    gamma2 = gamma.reshape(1, D).astype(jnp.float32)
    beta2 = beta.reshape(1, D).astype(jnp.float32)
    bias2 = bias.reshape(1, D_out).astype(jnp.float32)
    w_bf = w.astype(jnp.bfloat16)           # MXU-native weight storage

    grid = (R_pad // tm, D_out // tn)

    # VMEM budget: x (2x), xn scratch, W tile (2x), out tile (2x), params;
    # ~50% headroom, clamped to [16 MiB, 64 MiB] (v7x physical = 64 MiB).
    est = (2 * tm * D * x2.dtype.itemsize      # x double-buffered
           + tm * D * 2                        # xn scratch (bf16)
           + 2 * D * tn * 2                    # W tile double-buffered (bf16)
           + 2 * tm * tn * x2.dtype.itemsize   # out tile double-buffered
           + 3 * (D + D_out) * 4)              # gamma/beta/bias
    vmem_limit = min(max(int(1.5 * est), 16 * 1024 * 1024), 64 * 1024 * 1024)

    out = pl.pallas_call(
        _prenorm_linear_kernel,
        out_shape=jax.ShapeDtypeStruct((R_pad, D_out), x.dtype),
        grid_spec=pltpu.PrefetchScalarGridSpec(
            num_scalar_prefetch=0,
            grid=grid,
            in_specs=[
                pl.BlockSpec((tm, D), lambda i, j: (i, 0)),            # x rows
                pl.BlockSpec((1, D), lambda i, j: (0, 0),
                             pipeline_mode=pl.Buffered(1)),            # gamma
                pl.BlockSpec((1, D), lambda i, j: (0, 0),
                             pipeline_mode=pl.Buffered(1)),            # beta
                pl.BlockSpec((D, tn), lambda i, j: (0, j)),            # W cols
                pl.BlockSpec((1, tn), lambda i, j: (0, j)),            # bias cols
            ],
            out_specs=pl.BlockSpec((tm, tn), lambda i, j: (i, j)),
            scratch_shapes=[pltpu.VMEM((tm, D), jnp.bfloat16)],        # xn
        ),
        compiler_params=pltpu.CompilerParams(
            dimension_semantics=("parallel", "arbitrary"),
            vmem_limit_bytes=vmem_limit,
        ),
    )(x2, gamma2, beta2, w_bf, bias2)

    return out[:R].reshape(B, S, D_out)


def prenorm_reference(x, gamma, beta, w, bias):
    xf = x.astype(jnp.float32)
    mean = jnp.mean(xf, axis=-1, keepdims=True)
    var = jnp.mean(jnp.square(xf - mean), axis=-1, keepdims=True)
    xn = (xf - mean) / jnp.sqrt(var + EPS)
    xn = xn * gamma + beta
    return (xn @ w + bias).astype(x.dtype)


if __name__ == "__main__":
    # Small but lane-dense shapes (D multiple of 128), exercising both the
    # row-tile grid axis and the N-tile (weight column) grid axis.
    B, S, D, D_out = 2, 16, 128, 256

    key = jax.random.PRNGKey(0)
    kx, kw, kb = jax.random.split(key, 3)

    x = jax.random.normal(kx, (B, S, D), dtype=jnp.float32)

    # LayerNorm params: PyTorch default init (gamma=1, beta=0).
    gamma = jnp.ones((D,), jnp.float32)
    beta = jnp.zeros((D,), jnp.float32)

    # fn = Linear(D, D_out): deterministic synthetic weights (stored as [in, out]).
    w = jax.random.normal(kw, (D, D_out), dtype=jnp.float32) * 0.05
    bias = jax.random.normal(kb, (D_out,), dtype=jnp.float32) * 0.05

    # Small tiles for the test so the grid is (2, 2) and the pipelined /
    # scratch-reuse paths are actually exercised.
    out = prenorm_linear(x, gamma, beta, w, bias, block_rows=16, block_cols=128)
    out = jax.block_until_ready(out)

    ref = prenorm_reference(x, gamma, beta, w, bias)
    assert out.shape == (B, S, D_out)
    # bf16 matmul inputs (f32 accumulation) vs pure-f32 reference.
    assert jnp.allclose(out, ref, atol=2e-2, rtol=2e-2), "mismatch vs reference"

    print("KERNEL_OK")
</pallas_src>

<mosaic_0001>
module attributes {stable_mosaic.version = 11 : i64} {
  func.func @_prenorm_linear_kernel(%arg0: i32, %arg1: i32, %arg2: memref<16x128xf32, #tpu.memory_space<vmem>>, %arg3: memref<1x128xf32, #tpu.memory_space<vmem>>, %arg4: memref<1x128xf32, #tpu.memory_space<vmem>>, %arg5: memref<128x128xbf16, #tpu.memory_space<vmem>>, %arg6: memref<1x128xf32, #tpu.memory_space<vmem>>, %arg7: memref<16x128xf32, #tpu.memory_space<vmem>>, %arg8: memref<16x128xbf16, #tpu.memory_space<vmem>>) attributes {dimension_semantics = [#tpu.dimension_semantics<parallel>, #tpu.dimension_semantics<arbitrary>], iteration_bounds = array<i64: 2, 2>, scalar_prefetch = 0 : i64, scratch_operands = 1 : i64, tpu.core_type = #tpu.core_type<tc>, window_params = [{transform_indices = @transform_0, window_bounds = array<i64: 16, 128>}, {pipeline_mode = #tpu.pipeline_mode<synchronous>, transform_indices = @transform_1, window_bounds = array<i64: 1, 128>}, {pipeline_mode = #tpu.pipeline_mode<synchronous>, transform_indices = @transform_2, window_bounds = array<i64: 1, 128>}, {transform_indices = @transform_3, window_bounds = array<i64: 128, 128>}, {transform_indices = @transform_4, window_bounds = array<i64: 1, 128>}, {transform_indices = @transform_5, window_bounds = array<i64: 16, 128>}]} {
    %c0_i32 = arith.constant 0 : i32
    %0 = arith.cmpi eq, %arg1, %c0_i32 : i32
    %1 = arith.extui %0 : i1 to i32
    %c0_i32_0 = arith.constant 0 : i32
    %2 = arith.cmpi ne, %1, %c0_i32_0 : i32
    scf.if %2 {
      %c0_8 = arith.constant 0 : index
      %c0_9 = arith.constant 0 : index
      %10 = vector.load %arg2[%c0_8, %c0_9] : memref<16x128xf32, #tpu.memory_space<vmem>>, vector<16x128xf32>
      %cst_10 = arith.constant dense<0.000000e+00> : vector<16xf32>
      %11 = vector.multi_reduction <add>, %10, %cst_10 [1] : vector<16x128xf32> to vector<16xf32>
      %12 = vector.shape_cast %11 : vector<16xf32> to vector<16x1xf32>
      %cst_11 = arith.constant 1.280000e+02 : f32
      %13 = vector.broadcast %cst_11 : f32 to vector<16x1xf32>
      %14 = arith.divf %12, %13 : vector<16x1xf32>
      %15 = vector.broadcast %14 : vector<16x1xf32> to vector<16x128xf32>
      %16 = arith.subf %10, %15 : vector<16x128xf32>
      %17 = arith.mulf %16, %16 : vector<16x128xf32>
      %cst_12 = arith.constant dense<0.000000e+00> : vector<16xf32>
      %18 = vector.multi_reduction <add>, %17, %cst_12 [1] : vector<16x128xf32> to vector<16xf32>
      %19 = vector.shape_cast %18 : vector<16xf32> to vector<16x1xf32>
      %cst_13 = arith.constant 1.280000e+02 : f32
      %20 = vector.broadcast %cst_13 : f32 to vector<16x1xf32>
      %21 = arith.divf %19, %20 : vector<16x1xf32>
      %22 = vector.broadcast %14 : vector<16x1xf32> to vector<16x128xf32>
      %23 = arith.subf %10, %22 : vector<16x128xf32>
      %cst_14 = arith.constant 9.99999974E-6 : f32
      %24 = vector.broadcast %cst_14 : f32 to vector<16x1xf32>
      %25 = arith.addf %21, %24 : vector<16x1xf32>
      %26 = math.rsqrt %25 : vector<16x1xf32>
      %27 = vector.broadcast %26 : vector<16x1xf32> to vector<16x128xf32>
      %28 = arith.mulf %23, %27 : vector<16x128xf32>
      %c0_15 = arith.constant 0 : index
      %c0_16 = arith.constant 0 : index
      %29 = vector.load %arg3[%c0_15, %c0_16] : memref<1x128xf32, #tpu.memory_space<vmem>>, vector<1x128xf32>
      %30 = vector.broadcast %29 : vector<1x128xf32> to vector<16x128xf32>
      %31 = arith.mulf %28, %30 : vector<16x128xf32>
      %c0_17 = arith.constant 0 : index
      %c0_18 = arith.constant 0 : index
      %32 = vector.load %arg4[%c0_17, %c0_18] : memref<1x128xf32, #tpu.memory_space<vmem>>, vector<1x128xf32>
      %33 = vector.broadcast %32 : vector<1x128xf32> to vector<16x128xf32>
      %34 = arith.addf %31, %33 : vector<16x128xf32>
      %35 = arith.truncf %34 : vector<16x128xf32> to vector<16x128xbf16>
      %c0_19 = arith.constant 0 : index
      %c0_20 = arith.constant 0 : index
      %36 = vector.load %arg8[%c0_19, %c0_20] : memref<16x128xbf16, #tpu.memory_space<vmem>>, vector<16x128xbf16>
      tpu.vector_store %arg8[%c0_19, %c0_20], %35 {strides = array<i32>} : memref<16x128xbf16, #tpu.memory_space<vmem>>, vector<16x128xbf16>,
    } else {
    }
    %c0 = arith.constant 0 : index
    %c0_1 = arith.constant 0 : index
    %3 = vector.load %arg8[%c0, %c0_1] : memref<16x128xbf16, #tpu.memory_space<vmem>>, vector<16x128xbf16>
    %c0_2 = arith.constant 0 : index
    %c0_3 = arith.constant 0 : index
    %4 = vector.load %arg5[%c0_2, %c0_3] : memref<128x128xbf16, #tpu.memory_space<vmem>>, vector<128x128xbf16>
    %cst = arith.constant dense<0.000000e+00> : vector<16x128xf32>
    %5 = tpu.matmul %3, %4, %cst {dimension_numbers = #tpu.dot_dimension_numbers<[1], [0], [0], [1], [0, 0, 1, 1], [], []>} : vector<16x128xbf16>, vector<128x128xbf16>, vector<16x128xf32> -> vector<16x128xf32>
    %c0_4 = arith.constant 0 : index
    %c0_5 = arith.constant 0 : index
    %6 = vector.load %arg6[%c0_4, %c0_5] : memref<1x128xf32, #tpu.memory_space<vmem>>, vector<1x128xf32>
    %7 = vector.broadcast %6 : vector<1x128xf32> to vector<16x128xf32>
    %8 = arith.addf %5, %7 : vector<16x128xf32>
    %c0_6 = arith.constant 0 : index
    %c0_7 = arith.constant 0 : index
    %9 = vector.load %arg7[%c0_6, %c0_7] : memref<16x128xf32, #tpu.memory_space<vmem>>, vector<16x128xf32>
    tpu.vector_store %arg7[%c0_6, %c0_7], %8 {strides = array<i32>} : memref<16x128xf32, #tpu.memory_space<vmem>>, vector<16x128xf32>,
    return
  }
  func.func @transform_0(%arg0: i32, %arg1: i32) -> (i32, i32) {
    %c0_i32 = arith.constant 0 : i32
    %c0_i32_0 = arith.constant 0 : i32
    return %arg0, %c0_i32 : i32, i32
  }
  func.func @transform_1(%arg0: i32, %arg1: i32) -> (i32, i32) {
    %c0_i32 = arith.constant 0 : i32
    %c0_i32_0 = arith.constant 0 : i32
    %c0_i32_1 = arith.constant 0 : i32
    return %c0_i32, %c0_i32_0 : i32, i32
  }
  func.func @transform_2(%arg0: i32, %arg1: i32) -> (i32, i32) {
    %c0_i32 = arith.constant 0 : i32
    %c0_i32_0 = arith.constant 0 : i32
    %c0_i32_1 = arith.constant 0 : i32
    return %c0_i32, %c0_i32_0 : i32, i32
  }
  func.func @transform_3(%arg0: i32, %arg1: i32) -> (i32, i32) {
    %c0_i32 = arith.constant 0 : i32
    %c0_i32_0 = arith.constant 0 : i32
    return %c0_i32, %arg1 : i32, i32
  }
  func.func @transform_4(%arg0: i32, %arg1: i32) -> (i32, i32) {
    %c0_i32 = arith.constant 0 : i32
    %c0_i32_0 = arith.constant 0 : i32
    return %c0_i32, %arg1 : i32, i32
  }
  func.func @transform_5(%arg0: i32, %arg1: i32) -> (i32, i32) {
    %c0_i32 = arith.constant 0 : i32
    return %arg0, %arg1 : i32, i32
  }
}

</mosaic_0001>

<llo_original>
// kernel: tpu_custom_call.1
$region0: #{tpu_custom_call.1}
  #allocation0 [shape = 'u32[]', space=smem, size = 0x4, offset = 0x4, fixed_abs, tag = 'smem constant byte address 0x4 - core index']
  #allocation1 [shape = 'u32[72,128]{1,0:T(1,128)}', space=vmem, size = 0x9000, scoped, tag = 'internal scratch']
  #allocation2 [shape = 'bf16[16,128]{1,0:T(8,128)(2,1)}', space=vmem, size = 0x1000, scoped, tag = 'scratch operand']
  %s0 = inlined_call_operand.hbm [shape: f32[32,128], index: 0, kind: input, shape index: {}]
  %s1 = inlined_call_operand.hbm [shape: f32[1,128], index: 1, kind: input, shape index: {}]
  %s2 = inlined_call_operand.vmem [shape: f32[1,128], index: 2, kind: input, shape index: {}]
  %s3 = inlined_call_operand.hbm [shape: bf16[128,256], index: 3, kind: input, shape index: {}]
  %s4 = inlined_call_operand.vmem [shape: f32[1,256], index: 4, kind: input, shape index: {}]
  %s5 = inlined_call_operand.hbm [shape: f32[32,256], index: 5, kind: output, shape index: {}]
  %s6 = sld [smem:[#allocation0]]
  $region69: #{tpu_custom_call.1} parent=0
    _
  %s8 = ssub.s32 1, %s6
  %s9 = scalar_select 0, %s8, %s6
  $region1: #{tpu_custom_call.1} parent=0
    #allocation3 [shape = 'u8[16384]{0}', space=vmem, size = 0x4000, scoped, tag = 'input window, operand 0']
    #allocation4 [shape = 's32[2]{0}', space=sflag, size = 0x8, scoped, tag = 'scoped memory for tpu_custom_call.1']
    #allocation5 [shape = 's32[2]{0}', space=sflag, size = 0x8, scoped, tag = 'scoped memory for tpu_custom_call.1']
    #allocation6 [shape = 'u8[512]{0}', space=vmem, size = 0x400, scoped, tag = 'input window, operand 1, single buffered']
    #allocation7 [shape = 's32[1]{0}', space=sflag, size = 0x4, scoped, tag = 'scoped memory for tpu_custom_call.1']
    #allocation8 [shape = 'u8[65536]{0}', space=vmem, size = 0x10000, scoped, tag = 'input window, operand 3']
    #allocation9 [shape = 'u8[16384]{0}', space=vmem, size = 0x4000, scoped, tag = 'output window, operand 0']
    %10 = vsyncpa [#allocation4], 0
    %s11 = scalar_lea.sflag [#allocation4], 1
    %12 = vsyncpa %s11, 0
    %13 = vsyncpa [#allocation7], 0
    %14 = vsyncpa [#allocation5], 0
    %s15 = scalar_lea.sflag [#allocation5], 1
    %16 = vsyncpa %s15, 0
    loop: start=0, step=1, limit=6
    $region2: #{tpu_custom_call.1} parent=1 // loop_pre_header
      _
    $region3: #{tpu_custom_call.1} parent=1 // loop_header
      %s18 = sphi 0, %s22
      %p19 = scmp.ge.s32.totalorder %s18, 6
      %s25 = sphi 0, %s37
      %s26 = sphi 0, %s33
      %s27 = sphi 0, %s25
      %s28 = sphi 0, %s26
      %s29 = sphi 0, %s27
      %s30 = sphi 0, %s28
      %s40 = sphi 0, %s42
      %s43 = sphi 0, %s40
      %s44 = sphi 0, %s43
      %s60 = sphi 0, %s44
      %s64 = sphi 0, %s64
      %s66 = sphi 0, %s64
      %s67 = sphi 0, %s66
      %s81 = sphi 0, %s67
      %s85 = sphi 0, %s85
      %s87 = sphi 0, %s85
      %s88 = sphi 0, %s87
      %s102 = sphi 0, %s88
      %s108 = sphi 0, %s110
      %s111 = sphi 0, %s108
      %s112 = sphi 0, %s111
      %s128 = sphi 0, %s112
      %s134 = sphi 0, %s136
      %s137 = sphi 0, %s134
      %s138 = sphi 0, %s137
      %s154 = sphi 0, %s138
      %s162 = sphi 0, %s164
      %s165 = sphi 0, %s162
      %s166 = sphi 0, %s165
      %s182 = sphi 0, %s166
    $region4: #{tpu_custom_call.1} parent=1 // loop_header_branch
      %21 = sbr.rel (%p19) target = $region8
    $region5: #{tpu_custom_call.1} parent=1 // loop_body
      %s23 = ssub.s32 %s18, 1
      %s24 = ssub.s32 %s18, 2
      %s31 = sadd.s32 1, %s26
      %p32 = scmp.ge.s32.totalorder %s31, 2
      %s33 = scalar_select %p32, 0, %s31
      %s34 = sadd.s32 1, %s25
      %s35 = scalar_select %p32, %s34, %s25
      %p36 = scmp.ge.s32.totalorder %s35, 2
      %s37 = scalar_select %p36, 0, %s35
      %s38 = ssub.s32 %s25, %s37
      %p39 = scmp.eq.s32.totalorder %s38, 0
      %s41 = sadd.s32 %s40, 1
      %s42 = scalar_select %p39, %s40, %s41
      %p45 = pneg %p39
      %p46 = scmp.eq.s32.totalorder %s18, 3
      %p47 = por %p45, %p46
      %p48 = scmp.ne.s32.totalorder %s40, %s43
      %p49 = scmp.eq.s32.totalorder %s18, 0
      %p50 = por %p48, %p49
      %p51 = scmp.ne.s32.totalorder %s40, %s43
      %p52 = scmp.eq.s32.totalorder %s23, 3
      %p53 = por %p51, %p52
      %p54 = scmp.ne.s32.totalorder %s43, %s44
      %p55 = scmp.eq.s32.totalorder %s23, 0
      %p56 = por %p54, %p55
      %p57 = scmp.ne.s32.totalorder %s43, %s44
      %p58 = scmp.eq.s32.totalorder %s24, 3
      %p59 = por %p57, %p58
      %p61 = scmp.ne.s32.totalorder %s44, %s60
      %p62 = scmp.eq.s32.totalorder %s24, 0
      %p63 = por %p61, %p62
      %s65 = sadd.s32 %s64, 1
      %p68 = scmp.eq.s32.totalorder %s18, 3
      %p69 = scmp.ne.s32.totalorder %s64, %s66
      %p70 = scmp.eq.s32.totalorder %s18, 0
      %p71 = por %p69, %p70
      %p72 = scmp.ne.s32.totalorder %s64, %s66
      %p73 = scmp.eq.s32.totalorder %s23, 3
      %p74 = por %p72, %p73
      %p75 = scmp.ne.s32.totalorder %s66, %s67
      %p76 = scmp.eq.s32.totalorder %s23, 0
      %p77 = por %p75, %p76
      %p78 = scmp.ne.s32.totalorder %s66, %s67
      %p79 = scmp.eq.s32.totalorder %s24, 3
      %p80 = por %p78, %p79
      %p82 = scmp.ne.s32.totalorder %s67, %s81
      %p83 = scmp.eq.s32.totalorder %s24, 0
      %p84 = por %p82, %p83
      %s86 = sadd.s32 %s85, 1
      %p89 = scmp.eq.s32.totalorder %s18, 3
      %p90 = scmp.ne.s32.totalorder %s85, %s87
      %p91 = scmp.eq.s32.totalorder %s18, 0
      %p92 = por %p90, %p91
      %p93 = scmp.ne.s32.totalorder %s85, %s87
      %p94 = scmp.eq.s32.totalorder %s23, 3
      %p95 = por %p93, %p94
      %p96 = scmp.ne.s32.totalorder %s87, %s88
      %p97 = scmp.eq.s32.totalorder %s23, 0
      %p98 = por %p96, %p97
      %p99 = scmp.ne.s32.totalorder %s87, %s88
      %p100 = scmp.eq.s32.totalorder %s24, 3
      %p101 = por %p99, %p100
      %p103 = scmp.ne.s32.totalorder %s88, %s102
      %p104 = scmp.eq.s32.totalorder %s24, 0
      %p105 = por %p103, %p104
      %s106 = ssub.s32 %s26, %s33
      %p107 = scmp.eq.s32.totalorder %s106, 0
      %s109 = sadd.s32 %s108, 1
      %s110 = scalar_select %p107, %s108, %s109
      %p113 = pneg %p107
      %p114 = scmp.eq.s32.totalorder %s18, 3
      %p115 = por %p113, %p114
      %p116 = scmp.ne.s32.totalorder %s108, %s111
      %p117 = scmp.eq.s32.totalorder %s18, 0
      %p118 = por %p116, %p117
      %p119 = scmp.ne.s32.totalorder %s108, %s111
      %p120 = scmp.eq.s32.totalorder %s23, 3
      %p121 = por %p119, %p120
      %p122 = scmp.ne.s32.totalorder %s111, %s112
      %p123 = scmp.eq.s32.totalorder %s23, 0
      %p124 = por %p122, %p123
      %p125 = scmp.ne.s32.totalorder %s111, %s112
      %p126 = scmp.eq.s32.totalorder %s24, 3
      %p127 = por %p125, %p126
      %p129 = scmp.ne.s32.totalorder %s112, %s128
      %p130 = scmp.eq.s32.totalorder %s24, 0
      %p131 = por %p129, %p130
      %s132 = ssub.s32 %s26, %s33
      %p133 = scmp.eq.s32.totalorder %s132, 0
      %s135 = sadd.s32 %s134, 1
      %s136 = scalar_select %p133, %s134, %s135
      %p139 = pneg %p133
      %p140 = scmp.eq.s32.totalorder %s18, 3
      %p141 = por %p139, %p140
      %p142 = scmp.ne.s32.totalorder %s134, %s137
      %p143 = scmp.eq.s32.totalorder %s18, 0
      %p144 = por %p142, %p143
      %p145 = scmp.ne.s32.totalorder %s134, %s137
      %p146 = scmp.eq.s32.totalorder %s23, 3
      %p147 = por %p145, %p146
      %p148 = scmp.ne.s32.totalorder %s137, %s138
      %p149 = scmp.eq.s32.totalorder %s23, 0
      %p150 = por %p148, %p149
      %p151 = scmp.ne.s32.totalorder %s137, %s138
      %p152 = scmp.eq.s32.totalorder %s24, 3
      %p153 = por %p151, %p152
      %p155 = scmp.ne.s32.totalorder %s138, %s154
      %p156 = scmp.eq.s32.totalorder %s24, 0
      %p157 = por %p155, %p156
      %s158 = ssub.s32 %s25, %s37
      %s159 = ssub.s32 %s26, %s33
      %s160 = sor.u32 %s158, %s159
      %p161 = scmp.eq.s32.totalorder %s160, 0
      %s163 = sadd.s32 %s162, 1
      %s164 = scalar_select %p161, %s162, %s163
      %p167 = pneg %p161
      %p168 = scmp.eq.s32.totalorder %s18, 3
      %p169 = por %p167, %p168
      %p170 = scmp.ne.s32.totalorder %s162, %s165
      %p171 = scmp.eq.s32.totalorder %s18, 0
      %p172 = por %p170, %p171
      %p173 = scmp.ne.s32.totalorder %s162, %s165
      %p174 = scmp.eq.s32.totalorder %s23, 3
      %p175 = por %p173, %p174
      %p176 = scmp.ne.s32.totalorder %s165, %s166
      %p177 = scmp.eq.s32.totalorder %s23, 0
      %p178 = por %p176, %p177
      %p179 = scmp.ne.s32.totalorder %s165, %s166
      %p180 = scmp.eq.s32.totalorder %s24, 3
      %p181 = por %p179, %p180
      %p183 = scmp.ne.s32.totalorder %s166, %s182
      %p184 = scmp.eq.s32.totalorder %s24, 0
      %p185 = por %p183, %p184
      %p186 = scmp.le.s32.totalorder 1, %s18
      %p187 = scmp.lt.s32.totalorder %s18, 5
      %p188 = pnand %p186, %p187
      %p189 = pneg %p188
      // Predicated region
      $region9: #{tpu_custom_call.1} parent=5 // pred_check
        _
      $region10: #{tpu_custom_call.1} parent=5 // pred_check_branch
        %191 = sbr.rel (%p188) target = $region12
      $region11: #{tpu_custom_call.1} parent=5 // pred_region
        %s192 = ssub.s32 %s18, 1
        // Predicated region
        $region13: #{tpu_custom_call.1} parent=11 // pred_check
          %p193 = pneg %p77
        $region14: #{tpu_custom_call.1} parent=11 // pred_check_branch
          %195 = sbr.rel (%p193) target = $region16
        $region15: #{tpu_custom_call.1} parent=11 // pred_region
          %197 = vsyncadd [#allocation7], 0
          %s199 = sshll.u32 %s1, 4
          %s200 = int_to_ptr.hbm [resolvable:$true] %s199
          %s201 = sshll.u32 [#allocation6], 4
          %s202 = int_to_ptr.vmem [resolvable:$true] %s201
          %204 = dma.hbm_to_vmem [thread:$0]  %s200, 16, %s202, [#allocation7]
        $region16: #{tpu_custom_call.1} parent=11 // pred_fallthru
          _
        // Predicated region
        $region17: #{tpu_custom_call.1} parent=11 // pred_check
          %p205 = pneg %p98
        $region18: #{tpu_custom_call.1} parent=11 // pred_check_branch
          %207 = sbr.rel (%p205) target = $region20
        $region19: #{tpu_custom_call.1} parent=11 // pred_region
          _
        $region20: #{tpu_custom_call.1} parent=11 // pred_fallthru
          _
      $region12: #{tpu_custom_call.1} parent=5 // pred_fallthru
        _
      %p208 = scmp.lt.s32.totalorder %s18, 4
      // Predicated region
      $region21: #{tpu_custom_call.1} parent=5 // pred_check
        %p209 = pneg %p208
      $region22: #{tpu_custom_call.1} parent=5 // pred_check_branch
        %211 = sbr.rel (%p209) target = $region24
      $region23: #{tpu_custom_call.1} parent=5 // pred_region
        // Predicated region
        $region25: #{tpu_custom_call.1} parent=23 // pred_check
          %p212 = pneg %p50
        $region26: #{tpu_custom_call.1} parent=23 // pred_check_branch
          %214 = sbr.rel (%p212) target = $region28
        $region27: #{tpu_custom_call.1} parent=23 // pred_region
          %s215 = sand.u32 %s18, 1
          %s216 = scalar_lea.sflag [#allocation4], %s215
          %s217 = sand.u32 %s40, 1
          %s218 = smul.addr %s217, 16
          %s219 = scalar_lea.vmem [#allocation3], %s218
          %s220 = smul.u32 2, %s25
          %222 = vsyncadd %s216, 0
          %s223 = smul.addr %s220, 8
          %s224 = scalar_lea.hbm %s0, %s223
          %s225 = sshll.u32 %s224, 4
          %s226 = int_to_ptr.hbm [resolvable:$true] %s225
          %s227 = sshll.u32 %s219, 4
          %s228 = int_to_ptr.vmem [resolvable:$true] %s227
          %233 = dma.hbm_to_vmem [thread:$0]  %s226, 256, %s228, %s216, 128, 128, 8
        $region28: #{tpu_custom_call.1} parent=23 // pred_fallthru
          _
        // Predicated region
        $region29: #{tpu_custom_call.1} parent=23 // pred_check
          %p234 = pneg %p118
        $region30: #{tpu_custom_call.1} parent=23 // pred_check_branch
          %236 = sbr.rel (%p234) target = $region32
        $region31: #{tpu_custom_call.1} parent=23 // pred_region
          %s237 = sand.u32 %s18, 1
          %s238 = scalar_lea.sflag [#allocation4], %s237
          %s239 = sand.u32 %s108, 1
          %s240 = smul.addr %s239, 64
          %s241 = scalar_lea.vmem [#allocation8], %s240
          %243 = vsyncadd %s238, 0
          %s244 = smul.addr %s26, 4
          %s245 = scalar_lea.hbm %s3, %s244
          %s246 = sshll.u32 %s245, 4
          %s247 = int_to_ptr.hbm [resolvable:$true] %s246
          %s248 = sshll.u32 %s241, 4
          %s249 = int_to_ptr.vmem [resolvable:$true] %s248
          %254 = dma.hbm_to_vmem [thread:$0]  %s247, 1024, %s249, %s238, 128, 64, 4
        $region32: #{tpu_custom_call.1} parent=23 // pred_fallthru
          _
        // Predicated region
        $region33: #{tpu_custom_call.1} parent=23 // pred_check
          %p255 = pneg %p144
        $region34: #{tpu_custom_call.1} parent=23 // pred_check_branch
          %257 = sbr.rel (%p255) target = $region36
        $region35: #{tpu_custom_call.1} parent=23 // pred_region
          %p258 = scmp.lt.s32.totalorder %s26, 1
          %s259 = scalar_select %p258, %s26, 1
          %s260 = scalar_lea.vmem %s4, %s259
        $region36: #{tpu_custom_call.1} parent=23 // pred_fallthru
          _
      $region24: #{tpu_custom_call.1} parent=5 // pred_fallthru
        _
      %p261 = scmp.le.s32.totalorder 1, %s18
      %p262 = scmp.lt.s32.totalorder %s18, 5
      %p263 = pnand %p261, %p262
      %p264 = pneg %p263
      // Predicated region
      $region37: #{tpu_custom_call.1} parent=5 // pred_check
        _
      $region38: #{tpu_custom_call.1} parent=5 // pred_check_branch
        %266 = sbr.rel (%p263) target = $region40
      $region39: #{tpu_custom_call.1} parent=5 // pred_region
        %s267 = ssub.s32 %s18, 1
        %s268 = sand.u32 %s23, 1
        %s269 = scalar_lea.sflag [#allocation4], %s268
        %s270 = sand.u32 %s43, 1
        %s271 = smul.addr %s270, 16
        %s272 = scalar_lea.vmem [#allocation3], %s271
        // Predicated region
        $region41: #{tpu_custom_call.1} parent=39 // pred_check
          %p273 = pneg %p56
        $region42: #{tpu_custom_call.1} parent=39 // pred_check_branch
          %275 = sbr.rel (%p273) target = $region44
        $region43: #{tpu_custom_call.1} parent=39 // pred_region
          %277 = dma.done %s269, 256
        $region44: #{tpu_custom_call.1} parent=39 // pred_fallthru
          _
        // Predicated region
        $region45: #{tpu_custom_call.1} parent=39 // pred_check
          %p278 = pneg %p77
        $region46: #{tpu_custom_call.1} parent=39 // pred_check_branch
          %280 = sbr.rel (%p278) target = $region48
        $region47: #{tpu_custom_call.1} parent=39 // pred_region
          %282 = dma.done [#allocation7], 16
        $region48: #{tpu_custom_call.1} parent=39 // pred_fallthru
          _
        %s283 = sand.u32 %s23, 1
        %s284 = scalar_lea.sflag [#allocation4], %s283
        %s285 = sand.u32 %s111, 1
        %s286 = smul.addr %s285, 64
        %s287 = scalar_lea.vmem [#allocation8], %s286
        // Predicated region
        $region49: #{tpu_custom_call.1} parent=39 // pred_check
          %p288 = pneg %p124
        $region50: #{tpu_custom_call.1} parent=39 // pred_check_branch
          %290 = sbr.rel (%p288) target = $region52
        $region51: #{tpu_custom_call.1} parent=39 // pred_region
          %292 = dma.done %s284, 1024
        $region52: #{tpu_custom_call.1} parent=39 // pred_fallthru
          _
        %s293 = sand.u32 %s23, 1
        %s294 = scalar_lea.sflag [#allocation4], %s293
        %s295 = sand.u32 %s43, 1
        %s296 = smul.addr %s295, 16
        %s297 = scalar_lea.vmem [#allocation3], %s296
        %p298 = pneg %p56
        %p299 = pneg %p53
        %p300 = pneg %p77
        %p301 = pneg %p74
        %p302 = pneg %p98
        %p303 = pneg %p95
        %s304 = sand.u32 %s23, 1
        %s305 = scalar_lea.sflag [#allocation4], %s304
        %s306 = sand.u32 %s111, 1
        %s307 = smul.addr %s306, 64
        %s308 = scalar_lea.vmem [#allocation8], %s307
        %p309 = pneg %p124
        %p310 = pneg %p121
        %p311 = scmp.lt.s32.totalorder %s28, 1
        %s312 = scalar_select %p311, %s28, 1
        %s313 = scalar_lea.vmem %s4, %s312
        %p314 = pneg %p150
        %p315 = pneg %p147
        %p316 = pneg %p178
        %p317 = pneg %p175
        %s318 = sand.u32 %s165, 1
        %s319 = scalar_lea.sflag [#allocation5], %s318
        %s320 = sand.u32 %s165, 1
        %s321 = smul.addr %s320, 16
        %s322 = scalar_lea.vmem [#allocation9], %s321
        %s323 = smul.u32 2, %s27
        %p324 = scmp.lt.s32.totalorder %s28, 1
        %s325 = scalar_select %p324, %s28, 1
        %s326 = scalar_lea.vmem %s4, %s325
        %s327 = smul.u32 2, %s27
        %p328 = scmp.eq.s32.totalorder %s28, 0
        // Predicated region
        $region53: #{tpu_custom_call.1} parent=39 // pred_check
          %p329 = pneg %p328
        $region54: #{tpu_custom_call.1} parent=39 // pred_check_branch
          %331 = sbr.rel (%p329) target = $region56
        $region55: #{tpu_custom_call.1} parent=39 // pred_region
          %v332 = vld [vmem:[%s272] sm:$0xff]
          %v333 = vld [vmem:[%s272 + $0x8] sm:$0xff]
          %334 = vadd.xlane.f32.xlu0 %v332
          %v335 = vpop.xlane.xlu0 %334
          %336 = vadd.xlane.f32.xlu0 %v333
          %v337 = vpop.xlane.xlu0 %336
          %v338 = vrcp.pop 128.0
          %v339 = vmul.f32 128.0, %v338
          %v340 = vsub.f32 1.0, %v339
          %v341 = vmul.f32 %v338, %v340
          %v342 = vadd.f32 %v338, %v341
          %vm343 = vweird.f32 %v338
          %v344 = vsel %vm343, %v338, %v342
          %v345 = vmul.f32 %v335, %v344
          %v346 = vmul.f32 %v337, %v344
          %v347 = vsub.f32 %v332, %v345
          %v348 = vsub.f32 %v333, %v346
          %v349 = vmul.f32 %v347, %v347
          %v350 = vmul.f32 %v348, %v348
          %351 = vadd.xlane.f32.xlu0 %v349
          %v352 = vpop.xlane.xlu0 %351
          %353 = vadd.xlane.f32.xlu0 %v350
          %v354 = vpop.xlane.xlu0 %353
          %v355 = vmul.f32 %v352, %v344
          %v356 = vmul.f32 %v354, %v344
          %v357 = vadd.f32 %v355, 1e-05
          %v358 = vadd.f32 %v356, 1e-05
          %v359 = vrsqrt.pop %v357
          %v360 = vmul.f32 %v359, %v357
          %v361 = vmul.f32 %v360, %v359
          %v362 = vmul.f32 0.5, %v361
          %v363 = vsub.f32 1.5, %v362
          %v364 = vmul.f32 %v359, %v363
          %vm365 = vweird.f32 %v357
          %vm366 = vweird.f32 %v359
          %vm367 = vmor %vm365, %vm366
          %v368 = vsel %vm367, %v359, %v364
          %v369 = vrsqrt.pop %v358
          %v370 = vmul.f32 %v369, %v358
          %v371 = vmul.f32 %v370, %v369
          %v372 = vmul.f32 0.5, %v371
          %v373 = vsub.f32 1.5, %v372
          %v374 = vmul.f32 %v369, %v373
          %vm375 = vweird.f32 %v358
          %vm376 = vweird.f32 %v369
          %vm377 = vmor %vm375, %vm376
          %v378 = vsel %vm377, %v369, %v374
          %v379 = vmul.f32 %v347, %v368
          %v380 = vmul.f32 %v348, %v378
          %v381 = vld [vmem:[#allocation6] sm:$0x1]
          %v383 = vperm.slane %v381, 0
          %v385 = vmul.f32 %v379, %v383
          %v386 = vmul.f32 %v380, %v383
          %v387 = vld [vmem:[%s2] sm:$0x1]
          %v389 = vperm.slane %v387, 0
          %v391 = vadd.f32 %v385, %v389
          %v392 = vadd.f32 %v386, %v389
          %v393 = vpack.c.bf16 %v391, %v391
          %v394 = vpack.c.bf16 %v392, %v392
          %395 = vst [vmem:[#allocation2] sm:$0xf] %v393
          %396 = vst [vmem:[#allocation2 + $0x4] sm:$0xf] %v394
        $region56: #{tpu_custom_call.1} parent=39 // pred_fallthru
          _
        %v397 = vld [vmem:[#allocation2] sm:$0xf]
        %v398 = vld [vmem:[#allocation2 + $0x4] sm:$0xf]
        %v399 = vld [vmem:[%s287] sm:$0xf]
        %v400 = vld [vmem:[%s287 + $0x4] sm:$0xf]
        %v401 = vld [vmem:[%s287 + $0x8] sm:$0xf]
        %v402 = vld [vmem:[%s287 + $0xc] sm:$0xf]
        %v403 = vld [vmem:[%s287 + $0x10] sm:$0xf]
        %v404 = vld [vmem:[%s287 + $0x14] sm:$0xf]
        %v405 = vld [vmem:[%s287 + $0x18] sm:$0xf]
        %v406 = vld [vmem:[%s287 + $0x1c] sm:$0xf]
        %v407 = vld [vmem:[%s287 + $0x20] sm:$0xf]
        %v408 = vld [vmem:[%s287 + $0x24] sm:$0xf]
        %v409 = vld [vmem:[%s287 + $0x28] sm:$0xf]
        %v410 = vld [vmem:[%s287 + $0x2c] sm:$0xf]
        %v411 = vld [vmem:[%s287 + $0x30] sm:$0xf]
        %v412 = vld [vmem:[%s287 + $0x34] sm:$0xf]
        %v413 = vld [vmem:[%s287 + $0x38] sm:$0xf]
        %v414 = vld [vmem:[%s287 + $0x3c] sm:$0xf]
        %v415 = vld [vmem:[%s326] sm:$0x1]
        %v417 = vperm.slane %v415, 0
        %v421 = vunpack.c.l.b16 %v397
        %v422 = vunpack.c.l.b16 %v398
        %v423 = vpack.c.b16 %v422, %v421
        %v441 = vunpack.c.l.b16 %v399
        %v442 = vunpack.c.l.b16 %v400
        %v443 = vunpack.c.l.b16 %v401
        %v444 = vunpack.c.l.b16 %v402
        %v445 = vunpack.c.l.b16 %v403
        %v446 = vunpack.c.l.b16 %v404
        %v447 = vunpack.c.l.b16 %v405
        %v448 = vunpack.c.l.b16 %v406
        %v449 = vunpack.c.l.b16 %v407
        %v450 = vunpack.c.l.b16 %v408
        %v451 = vunpack.c.l.b16 %v409
        %v452 = vunpack.c.l.b16 %v410
        %v453 = vunpack.c.l.b16 %v411
        %v454 = vunpack.c.l.b16 %v412
        %v455 = vunpack.c.l.b16 %v413
        %v456 = vunpack.c.l.b16 %v414
        %v457 = vpack.c.b16 %v442, %v441
        %v458 = vpack.c.b16 %v444, %v443
        %v459 = vpack.c.b16 %v446, %v445
        %v460 = vpack.c.b16 %v448, %v447
        %v461 = vpack.c.b16 %v450, %v449
        %v462 = vpack.c.b16 %v452, %v451
        %v463 = vpack.c.b16 %v454, %v453
        %v464 = vpack.c.b16 %v456, %v455
        %473 = vmatpush.bf16.msra.mxu0 %v464
        %474 = vmatpush.bf16.msra.mxu0 %v463
        %475 = vmatpush.bf16.msra.mxu0 %v462
        %476 = vmatpush.bf16.msra.mxu0 %v461
        %477 = vmatpush.bf16.msra.mxu0 %v460
        %478 = vmatpush.bf16.msra.mxu0 %v459
        %479 = vmatpush.bf16.msra.mxu0 %v458
        %480 = vmatpush.bf16.msra.mxu0 %v457
        %481 = vmatmul.bf16.gmra.mxu0 %v423
        %v482 = vpop.f32.mrf.mxu0
        %v483 = vadd.f32 %v417, %v482
        %v484 = vpop.f32.mrf.mxu0
        %v485 = vadd.f32 %v417, %v484
        %486 = vdwg.mxu0
        %487 = vst [vmem:[%s322] sm:$0xff] %v483
        %488 = vst [vmem:[%s322 + $0x8] sm:$0xff] %v485
        %s489 = sand.u32 %s165, 1
        %s490 = scalar_lea.sflag [#allocation5], %s489
        %s491 = sand.u32 %s165, 1
        %s492 = smul.addr %s491, 16
        %s493 = scalar_lea.vmem [#allocation9], %s492
        // Predicated region
        $region57: #{tpu_custom_call.1} parent=39 // pred_check
          %p494 = pneg %p175
        $region58: #{tpu_custom_call.1} parent=39 // pred_check_branch
          %496 = sbr.rel (%p494) target = $region60
        $region59: #{tpu_custom_call.1} parent=39 // pred_region
          %s497 = smul.u32 2, %s27
          %499 = vsyncadd %s490, 0
          %s500 = smul.addr %s497, 2
          %s501 = sadd.s32 %s28, %s500
          %s502 = smul.addr %s501, 8
          %s503 = scalar_lea.hbm %s5, %s502
          %s504 = sshll.u32 %s493, 4
          %s505 = int_to_ptr.vmem [resolvable:$true] %s504
          %s506 = sshll.u32 %s503, 4
          %s507 = int_to_ptr.hbm [resolvable:$true] %s506
          %512 = dma.vmem_to_hbm [thread:$0]  %s505, 256, %s507, %s490, 128, 256, 8
        $region60: #{tpu_custom_call.1} parent=39 // pred_fallthru
          _
      $region40: #{tpu_custom_call.1} parent=5 // pred_fallthru
        _
      %p513 = scmp.le.s32.totalorder 2, %s18
      // Predicated region
      $region61: #{tpu_custom_call.1} parent=5 // pred_check
        %p514 = pneg %p513
      $region62: #{tpu_custom_call.1} parent=5 // pred_check_branch
        %516 = sbr.rel (%p514) target = $region64
      $region63: #{tpu_custom_call.1} parent=5 // pred_region
        %s517 = ssub.s32 %s18, 2
        // Predicated region
        $region65: #{tpu_custom_call.1} parent=63 // pred_check
          %p518 = pneg %p181
        $region66: #{tpu_custom_call.1} parent=63 // pred_check_branch
          %520 = sbr.rel (%p518) target = $region68
        $region67: #{tpu_custom_call.1} parent=63 // pred_region
          %s521 = sand.u32 %s166, 1
          %s522 = scalar_lea.sflag [#allocation5], %s521
          %s523 = sand.u32 %s166, 1
          %s524 = smul.addr %s523, 16
          %s525 = scalar_lea.vmem [#allocation9], %s524
          %527 = dma.done %s522, 256
        $region68: #{tpu_custom_call.1} parent=63 // pred_fallthru
          _
      $region64: #{tpu_custom_call.1} parent=5 // pred_fallthru
        _
    $region6: #{tpu_custom_call.1} parent=1 // loop_footer
      %s22 = sadd.s32 1, %s18
    $region7: #{tpu_custom_call.1} parent=1 // loop_footer_branch
      %17 = sbr.rel target = $region3
    $region8: #{tpu_custom_call.1} parent=1 // loop_exit
      _
    %528 = vsyncpa [#allocation4], 1
    %s529 = scalar_lea.sflag [#allocation4], 1
    %530 = vsyncpa %s529, 1
    %531 = vsyncpa [#allocation7], 1
    %532 = vsyncpa [#allocation5], 1
    %s533 = scalar_lea.sflag [#allocation5], 1
    %534 = vsyncpa %s533, 1

</llo_original>
